<compile_context>
chip_gen: v6e
topology: v6e:2x2x1
jax: 0.10.0
libtpu: 0.0.40
codegen_flags: <defaults>
</compile_context>

<pallas_src>
import jax
import jax.numpy as jnp
from jax.experimental import pallas as pl
from jax.experimental.pallas import tpu as pltpu


# ----------------------------------------------------------------------------
# Kernel
# ----------------------------------------------------------------------------
def _conv1x1_bn_relu_kernel(x_ref, w_ref, scale_ref, shift_ref, o_ref, acc_ref):
    # x_ref:     (t_k, t_hw)   spatial-on-lanes slab of one image (K slice)
    # w_ref:     (Cout, t_k)   1x1 conv weight K slice (resident if t_k == Cin)
    # scale_ref: (Cout, 1)     f32 BN scale  = gamma / sqrt(var + eps)
    # shift_ref: (Cout, 1)     f32 BN shift  = (bias - mean) * scale + beta
    # o_ref:     (Cout, t_hw)  output tile
    # acc_ref:   (Cout, t_hw)  f32 accumulator scratch (lives across K steps)
    k = pl.program_id(2)
    partial = jnp.dot(w_ref[...], x_ref[...], preferred_element_type=jnp.float32)

    @pl.when(k == 0)
    def _():
        acc_ref[...] = partial

    @pl.when(k > 0)
    def _():
        acc_ref[...] += partial

    @pl.when(k == pl.num_programs(2) - 1)
    def _():
        # BN + ReLU epilogue strictly in f32 (v5e VPU has no bf16; the extra
        # VALU mul/add per vreg is free filler under the HBM-bound regime).
        y = acc_ref[...] * scale_ref[...] + shift_ref[...]
        o_ref[...] = jnp.maximum(y, 0.0).astype(o_ref.dtype)


# ----------------------------------------------------------------------------
# Generation-aware budgeting + tile planning
# ----------------------------------------------------------------------------
def _vmem_budget_bytes():
    """~70% of physical VMEM (capped at 96 MiB); safe fallback = v7x size."""
    try:
        cap = int(pltpu.get_tpu_info().vmem_capacity_bytes)
    except Exception:                     # off-TPU / old runtime
        cap = 64 * 1024 * 1024            # assume the smallest (v7x) VMEM
    return max(32 * 1024 * 1024, min(int(cap * 0.70), 96 * 1024 * 1024))


def _plan_tiling(hw, cin, cout, x_item, w_item, out_item, budget):
    """Pick (t_hw, t_k). t_k always divides cin (no K-padding garbage)."""
    # --- K (Cin) tile: stream the weight only if it can't stay resident.
    t_k = cin
    if 2 * cout * cin * w_item > budget // 4:
        for cand in (1024, 512, 256, 128):
            if cin % cand == 0 and 2 * cout * cand * w_item <= budget // 4:
                t_k = cand
                break
        # else: no lane-aligned divisor -> keep full Cin; t_hw shrinks instead.

    # --- HW (lane) tile: bigger cap for thin-channel layers (fewer grid steps).
    ch = cin + cout
    max_t = 8192 if ch <= 512 else (4096 if ch <= 1024 else 2048)

    def working(t_hw):
        return (2 * t_k * t_hw * x_item        # double-buffered x block
                + 2 * cout * t_hw * out_item   # double-buffered out block
                + 2 * cout * t_k * w_item      # (double-buffered) weight block
                + cout * t_hw * 4              # f32 accumulator scratch
                + 4 * cout * 4)                # scale + shift

    if hw <= 128:
        return hw, t_k
    if hw <= max_t and working(hw) <= budget:      # budget checked here too
        return hw, t_k
    t_hw = min(max_t, max(hw // 128, 1) * 128)
    while t_hw > 128 and working(t_hw) > budget:
        t_hw -= 128
    return max(t_hw, 128), t_k


# ----------------------------------------------------------------------------
# Wrapper
# ----------------------------------------------------------------------------
def conv1x1_bn_relu(x_nchw, conv_w, conv_b, bn_gamma, bn_beta, bn_mean, bn_var,
                    eps=1e-5, mxu_dtype=None, out_dtype=None):
    """Forward of Conv1x1 module (conv1x1 + eval-mode BN + ReLU), NCHW in/out.

    mxu_dtype: optional cast for the matmul operands (e.g. jnp.bfloat16 on
    bf16-native MXUs when tolerance allows); accumulation & BN stay in f32.
    """
    N, Cin, H, W = x_nchw.shape
    Cout = conv_w.shape[0]
    HW = H * W

    compute_dtype = jnp.dtype(mxu_dtype) if mxu_dtype is not None else x_nchw.dtype
    out_dtype = jnp.dtype(out_dtype) if out_dtype is not None else x_nchw.dtype

    # Free reshape: NCHW -> (N, Cin, HW). No transpose, no extra HBM pass.
    x3d = x_nchw.reshape(N, Cin, HW).astype(compute_dtype)
    w = conv_w.reshape(Cout, Cin).astype(compute_dtype)

    # BN (running stats) as per-channel f32 scale + shift, applied in-kernel
    # after the matmul (kept out of the possibly low-precision weight).
    scale_vec = bn_gamma.astype(jnp.float32) / jnp.sqrt(
        bn_var.astype(jnp.float32) + eps)                              # (Cout,)
    shift_vec = ((conv_b.astype(jnp.float32) - bn_mean.astype(jnp.float32))
                 * scale_vec + bn_beta.astype(jnp.float32))            # (Cout,)
    scale = scale_vec.reshape(Cout, 1)
    shift = shift_vec.reshape(Cout, 1)

    x_item = jnp.dtype(compute_dtype).itemsize
    out_item = jnp.dtype(out_dtype).itemsize

    vmem_limit = _vmem_budget_bytes()
    t_hw, t_k = _plan_tiling(HW, Cin, Cout, x_item, x_item, out_item,
                             budget=int(vmem_limit * 0.85))
    num_j = pl.cdiv(HW, t_hw)
    num_k = Cin // t_k
    grid = (N, num_j, num_k)

    # Deeper pipelining only in the forced-small-tile fallback regime, where
    # per-step overhead / exposed DMA latency dominates.
    x_spec_kwargs = {}
    if t_hw <= 256 and t_hw < HW:
        x_spec_kwargs["pipeline_mode"] = pl.Buffered(3)

    # TODO(synk): for extremely large Cout (output block alone >> budget) add a
    # Cout grid axis as well; today t_hw just shrinks to compensate.

    flops = 2 * N * HW * Cin * Cout
    w_reads = (N * num_j if t_k < Cin else 1) * Cout * Cin * x_item
    bytes_accessed = (N * Cin * HW * x_item + N * Cout * HW * out_item
                      + w_reads + 2 * Cout * 4)

    out3d = pl.pallas_call(
        _conv1x1_bn_relu_kernel,
        out_shape=jax.ShapeDtypeStruct((N, Cout, HW), out_dtype),
        grid_spec=pltpu.PrefetchScalarGridSpec(
            num_scalar_prefetch=0,
            grid=grid,
            in_specs=[
                pl.BlockSpec((None, t_k, t_hw), lambda n, j, k: (n, k, j),
                             **x_spec_kwargs),
                pl.BlockSpec((Cout, t_k), lambda n, j, k: (0, k)),
                pl.BlockSpec((Cout, 1), lambda n, j, k: (0, 0)),
                pl.BlockSpec((Cout, 1), lambda n, j, k: (0, 0)),
            ],
            out_specs=pl.BlockSpec((None, Cout, t_hw), lambda n, j, k: (n, 0, j)),
            scratch_shapes=[pltpu.VMEM((Cout, t_hw), jnp.float32)],
        ),
        compiler_params=pltpu.CompilerParams(
            dimension_semantics=("parallel", "parallel", "arbitrary"),
            vmem_limit_bytes=vmem_limit),
        cost_estimate=pl.CostEstimate(
            flops=flops, transcendentals=0, bytes_accessed=bytes_accessed),
    )(x3d, w, scale, shift)

    # Free reshape back: (N, Cout, HW) -> NCHW.
    return out3d.reshape(N, Cout, H, W)


# ----------------------------------------------------------------------------
# Pure-JAX reference (conv1x1 + eval-mode BN + ReLU)
# ----------------------------------------------------------------------------
def _reference(x_nchw, conv_w, conv_b, bn_gamma, bn_beta, bn_mean, bn_var,
               eps=1e-5):
    N, Cin, H, W = x_nchw.shape
    Cout = conv_w.shape[0]
    xf = jnp.transpose(x_nchw, (0, 2, 3, 1)).reshape(-1, Cin)
    y = xf @ conv_w.reshape(Cout, Cin).T + conv_b
    y = (y - bn_mean) / jnp.sqrt(bn_var + eps) * bn_gamma + bn_beta
    y = jnp.maximum(y, 0.0)
    return y.reshape(N, H, W, Cout).transpose(0, 3, 1, 2)


if __name__ == "__main__":
    key = jax.random.PRNGKey(0)
    k_x, k_w, k_b, k_g, k_be, k_m, k_v = jax.random.split(key, 7)

    N, Cin, Cout, H, W = 2, 4, 8, 16, 16

    x = jax.random.normal(k_x, (N, Cin, H, W), dtype=jnp.float32)

    # Deterministic parameters (synthetic, matching nn.Conv2d / BatchNorm2d).
    conv_w = jax.random.normal(k_w, (Cout, Cin, 1, 1), jnp.float32) * 0.1
    conv_b = jax.random.normal(k_b, (Cout,), jnp.float32) * 0.1
    bn_gamma = 1.0 + 0.1 * jax.random.normal(k_g, (Cout,), jnp.float32)
    bn_beta = 0.1 * jax.random.normal(k_be, (Cout,), jnp.float32)
    bn_mean = 0.1 * jax.random.normal(k_m, (Cout,), jnp.float32)
    bn_var = jnp.abs(jax.random.normal(k_v, (Cout,), jnp.float32)) + 0.5

    out = conv1x1_bn_relu(x, conv_w, conv_b, bn_gamma, bn_beta, bn_mean, bn_var)
    out = jax.block_until_ready(out)

    ref = _reference(x, conv_w, conv_b, bn_gamma, bn_beta, bn_mean, bn_var)
    assert out.shape == (N, Cout, H, W)
    assert jnp.allclose(out, ref, atol=1e-5, rtol=1e-5), \
        float(jnp.max(jnp.abs(out - ref)))

    print("KERNEL_OK")
</pallas_src>

<mosaic_0001>
module attributes {stable_mosaic.version = 11 : i64} {
  func.func @_conv1x1_bn_relu_kernel(%arg0: i32, %arg1: i32, %arg2: i32, %arg3: memref<1x4x256xf32, #tpu.memory_space<vmem>>, %arg4: memref<8x4xf32, #tpu.memory_space<vmem>>, %arg5: memref<8x1xf32, #tpu.memory_space<vmem>>, %arg6: memref<8x1xf32, #tpu.memory_space<vmem>>, %arg7: memref<1x8x256xf32, #tpu.memory_space<vmem>>, %arg8: memref<8x256xf32, #tpu.memory_space<vmem>>) attributes {dimension_semantics = [#tpu.dimension_semantics<parallel>, #tpu.dimension_semantics<parallel>, #tpu.dimension_semantics<arbitrary>], iteration_bounds = array<i64: 2, 1, 1>, scalar_prefetch = 0 : i64, scratch_operands = 1 : i64, tpu.core_type = #tpu.core_type<tc>, window_params = [{transform_indices = @transform_0, window_bounds = array<i64: 1, 4, 256>}, {transform_indices = @transform_1, window_bounds = array<i64: 8, 4>}, {pipeline_mode = #tpu.pipeline_mode<synchronous>, transform_indices = @transform_2, window_bounds = array<i64: 8, 1>}, {pipeline_mode = #tpu.pipeline_mode<synchronous>, transform_indices = @transform_3, window_bounds = array<i64: 8, 1>}, {transform_indices = @transform_4, window_bounds = array<i64: 1, 8, 256>}]} {
    %c0 = arith.constant 0 : index
    %c0_0 = arith.constant 0 : index
    %0 = vector.load %arg4[%c0, %c0_0] : memref<8x4xf32, #tpu.memory_space<vmem>>, vector<8x4xf32>
    %c0_1 = arith.constant 0 : index
    %c0_2 = arith.constant 0 : index
    %c0_3 = arith.constant 0 : index
    %1 = vector.load %arg3[%c0_1, %c0_2, %c0_3] : memref<1x4x256xf32, #tpu.memory_space<vmem>>, vector<1x4x256xf32>
    %2 = vector.shape_cast %1 : vector<1x4x256xf32> to vector<4x256xf32>
    %cst = arith.constant dense<0.000000e+00> : vector<8x256xf32>
    %3 = tpu.matmul %0, %2, %cst {dimension_numbers = #tpu.dot_dimension_numbers<[1], [0], [0], [1], [0, 0, 1, 1], [], []>} : vector<8x4xf32>, vector<4x256xf32>, vector<8x256xf32> -> vector<8x256xf32>
    %c0_i32 = arith.constant 0 : i32
    %4 = arith.cmpi eq, %arg2, %c0_i32 : i32
    %5 = arith.extui %4 : i1 to i32
    %c0_i32_4 = arith.constant 0 : i32
    %6 = arith.cmpi ne, %5, %c0_i32_4 : i32
    scf.if %6 {
      %c0_9 = arith.constant 0 : index
      %c0_10 = arith.constant 0 : index
      %13 = vector.load %arg8[%c0_9, %c0_10] : memref<8x256xf32, #tpu.memory_space<vmem>>, vector<8x256xf32>
      tpu.vector_store %arg8[%c0_9, %c0_10], %3 {strides = array<i32>} : memref<8x256xf32, #tpu.memory_space<vmem>>, vector<8x256xf32>,
    } else {
    }
    %c0_i32_5 = arith.constant 0 : i32
    %7 = arith.cmpi sgt, %arg2, %c0_i32_5 : i32
    %8 = arith.extui %7 : i1 to i32
    %c0_i32_6 = arith.constant 0 : i32
    %9 = arith.cmpi ne, %8, %c0_i32_6 : i32
    scf.if %9 {
      %c0_9 = arith.constant 0 : index
      %c0_10 = arith.constant 0 : index
      %13 = vector.load %arg8[%c0_9, %c0_10] : memref<8x256xf32, #tpu.memory_space<vmem>>, vector<8x256xf32>
      %14 = arith.addf %13, %3 : vector<8x256xf32>
      %c0_11 = arith.constant 0 : index
      %c0_12 = arith.constant 0 : index
      %15 = vector.load %arg8[%c0_11, %c0_12] : memref<8x256xf32, #tpu.memory_space<vmem>>, vector<8x256xf32>
      tpu.vector_store %arg8[%c0_11, %c0_12], %14 {strides = array<i32>} : memref<8x256xf32, #tpu.memory_space<vmem>>, vector<8x256xf32>,
    } else {
    }
    %c0_i32_7 = arith.constant 0 : i32
    %10 = arith.cmpi eq, %arg2, %c0_i32_7 : i32
    %11 = arith.extui %10 : i1 to i32
    %c0_i32_8 = arith.constant 0 : i32
    %12 = arith.cmpi ne, %11, %c0_i32_8 : i32
    scf.if %12 {
      %c0_9 = arith.constant 0 : index
      %c0_10 = arith.constant 0 : index
      %13 = vector.load %arg8[%c0_9, %c0_10] : memref<8x256xf32, #tpu.memory_space<vmem>>, vector<8x256xf32>
      %c0_11 = arith.constant 0 : index
      %c0_12 = arith.constant 0 : index
      %14 = vector.load %arg5[%c0_11, %c0_12] : memref<8x1xf32, #tpu.memory_space<vmem>>, vector<8x1xf32>
      %15 = vector.broadcast %14 : vector<8x1xf32> to vector<8x256xf32>
      %16 = arith.mulf %13, %15 : vector<8x256xf32>
      %c0_13 = arith.constant 0 : index
      %c0_14 = arith.constant 0 : index
      %17 = vector.load %arg6[%c0_13, %c0_14] : memref<8x1xf32, #tpu.memory_space<vmem>>, vector<8x1xf32>
      %18 = vector.broadcast %17 : vector<8x1xf32> to vector<8x256xf32>
      %19 = arith.addf %16, %18 : vector<8x256xf32>
      %cst_15 = arith.constant 0.000000e+00 : f32
      %20 = vector.broadcast %cst_15 : f32 to vector<8x256xf32>
      %21 = arith.maximumf %19, %20 : vector<8x256xf32>
      %c0_16 = arith.constant 0 : index
      %c0_17 = arith.constant 0 : index
      %c0_18 = arith.constant 0 : index
      %22 = vector.load %arg7[%c0_16, %c0_17, %c0_18] : memref<1x8x256xf32, #tpu.memory_space<vmem>>, vector<1x8x256xf32>
      %23 = vector.shape_cast %22 : vector<1x8x256xf32> to vector<8x256xf32>
      %24 = vector.shape_cast %21 : vector<8x256xf32> to vector<1x8x256xf32>
      tpu.vector_store %arg7[%c0_16, %c0_17, %c0_18], %24 {strides = array<i32>} : memref<1x8x256xf32, #tpu.memory_space<vmem>>, vector<1x8x256xf32>,
    } else {
    }
    return
  }
  func.func @transform_0(%arg0: i32, %arg1: i32, %arg2: i32) -> (i32, i32, i32) {
    %c0_i32 = arith.constant 0 : i32
    return %arg0, %arg2, %arg1 : i32, i32, i32
  }
  func.func @transform_1(%arg0: i32, %arg1: i32, %arg2: i32) -> (i32, i32) {
    %c0_i32 = arith.constant 0 : i32
    %c0_i32_0 = arith.constant 0 : i32
    return %c0_i32, %arg2 : i32, i32
  }
  func.func @transform_2(%arg0: i32, %arg1: i32, %arg2: i32) -> (i32, i32) {
    %c0_i32 = arith.constant 0 : i32
    %c0_i32_0 = arith.constant 0 : i32
    %c0_i32_1 = arith.constant 0 : i32
    return %c0_i32, %c0_i32_0 : i32, i32
  }
  func.func @transform_3(%arg0: i32, %arg1: i32, %arg2: i32) -> (i32, i32) {
    %c0_i32 = arith.constant 0 : i32
    %c0_i32_0 = arith.constant 0 : i32
    %c0_i32_1 = arith.constant 0 : i32
    return %c0_i32, %c0_i32_0 : i32, i32
  }
  func.func @transform_4(%arg0: i32, %arg1: i32, %arg2: i32) -> (i32, i32, i32) {
    %c0_i32 = arith.constant 0 : i32
    %c0_i32_0 = arith.constant 0 : i32
    return %arg0, %c0_i32, %arg1 : i32, i32, i32
  }
}

</mosaic_0001>

<llo_original>
// kernel: tpu_custom_call.1
$region0: #{tpu_custom_call.1}
  #allocation0 [shape = 'u32[]', space=smem, size = 0x4, offset = 0x4, fixed_abs, tag = 'smem constant byte address 0x4 - core index']
  #allocation1 [shape = 'u32[144,128]{1,0:T(1,128)}', space=vmem, size = 0x12000, scoped, tag = 'internal scratch']
  #allocation2 [shape = 'f32[8,256]{1,0:T(8,128)}', space=vmem, size = 0x2000, scoped, tag = 'scratch operand']
  %s0 = inlined_call_operand.vmem [shape: f32[2,4,256], index: 0, kind: input, shape index: {}]
  %s1 = inlined_call_operand.vmem [shape: f32[8,4], index: 1, kind: input, shape index: {}]
  %s2 = inlined_call_operand.vmem [shape: f32[8,1], index: 2, kind: input, shape index: {}]
  %s3 = inlined_call_operand.vmem [shape: f32[8,1], index: 3, kind: input, shape index: {}]
  %s4 = inlined_call_operand.hbm [shape: f32[2,8,256], index: 4, kind: output, shape index: {}]
  %s5 = sld [smem:[#allocation0]]
  $region61: #{tpu_custom_call.1} parent=0
    _
  %s7 = ssub.s32 1, %s5
  %s8 = scalar_select 0, %s7, %s5
  $region1: #{tpu_custom_call.1} parent=0
    #allocation3 [shape = 'u8[16384]{0}', space=vmem, size = 0x4000, scoped, tag = 'output window, operand 0']
    #allocation4 [shape = 's32[2]{0}', space=sflag, size = 0x8, scoped, tag = 'scoped memory for tpu_custom_call.1']
    %9 = vsyncpa [#allocation4], 0
    %s10 = scalar_lea.sflag [#allocation4], 1
    %11 = vsyncpa %s10, 0
    loop: start=0, step=1, limit=4
    $region2: #{tpu_custom_call.1} parent=1 // loop_pre_header
      _
    $region3: #{tpu_custom_call.1} parent=1 // loop_header
      %s13 = sphi 0, %s17
      %p14 = scmp.ge.s32.totalorder %s13, 4
      %s20 = sphi 0, %s39
      %s21 = sphi 0, %s35
      %s22 = sphi 0, %s31
      %s23 = sphi 0, %s20
      %s24 = sphi 0, %s21
      %s25 = sphi 0, %s22
      %s26 = sphi 0, %s23
      %s27 = sphi 0, %s24
      %s28 = sphi 0, %s25
      %s46 = sphi 0, %s48
      %s49 = sphi 0, %s46
      %s50 = sphi 0, %s49
      %s66 = sphi 0, %s50
      %s72 = sphi 0, %s74
      %s75 = sphi 0, %s72
      %s76 = sphi 0, %s75
      %s92 = sphi 0, %s76
      %s96 = sphi 0, %s96
      %s98 = sphi 0, %s96
      %s99 = sphi 0, %s98
      %s113 = sphi 0, %s99
      %s117 = sphi 0, %s117
      %s119 = sphi 0, %s117
      %s120 = sphi 0, %s119
      %s134 = sphi 0, %s120
      %s142 = sphi 0, %s144
      %s145 = sphi 0, %s142
      %s146 = sphi 0, %s145
      %s162 = sphi 0, %s146
    $region4: #{tpu_custom_call.1} parent=1 // loop_header_branch
      %16 = sbr.rel (%p14) target = $region8
    $region5: #{tpu_custom_call.1} parent=1 // loop_body
      %s18 = ssub.s32 %s13, 1
      %s19 = ssub.s32 %s13, 2
      %s29 = sadd.s32 1, %s22
      %p30 = scmp.ge.s32.totalorder %s29, 1
      %s31 = scalar_select %p30, 0, %s29
      %s32 = sadd.s32 1, %s21
      %s33 = scalar_select %p30, %s32, %s21
      %p34 = scmp.ge.s32.totalorder %s33, 1
      %s35 = scalar_select %p34, 0, %s33
      %s36 = sadd.s32 1, %s20
      %s37 = scalar_select %p34, %s36, %s20
      %p38 = scmp.ge.s32.totalorder %s37, 2
      %s39 = scalar_select %p38, 0, %s37
      %s40 = ssub.s32 %s20, %s39
      %s41 = ssub.s32 %s22, %s31
      %s42 = sor.u32 %s40, %s41
      %s43 = ssub.s32 %s21, %s35
      %s44 = sor.u32 %s42, %s43
      %p45 = scmp.eq.s32.totalorder %s44, 0
      %s47 = sadd.s32 %s46, 1
      %s48 = scalar_select %p45, %s46, %s47
      %p51 = pneg %p45
      %p52 = scmp.eq.s32.totalorder %s13, 1
      %p53 = por %p51, %p52
      %p54 = scmp.ne.s32.totalorder %s46, %s49
      %p55 = scmp.eq.s32.totalorder %s13, 0
      %p56 = por %p54, %p55
      %p57 = scmp.ne.s32.totalorder %s46, %s49
      %p58 = scmp.eq.s32.totalorder %s18, 1
      %p59 = por %p57, %p58
      %p60 = scmp.ne.s32.totalorder %s49, %s50
      %p61 = scmp.eq.s32.totalorder %s18, 0
      %p62 = por %p60, %p61
      %p63 = scmp.ne.s32.totalorder %s49, %s50
      %p64 = scmp.eq.s32.totalorder %s19, 1
      %p65 = por %p63, %p64
      %p67 = scmp.ne.s32.totalorder %s50, %s66
      %p68 = scmp.eq.s32.totalorder %s19, 0
      %p69 = por %p67, %p68
      %s70 = ssub.s32 %s22, %s31
      %p71 = scmp.eq.s32.totalorder %s70, 0
      %s73 = sadd.s32 %s72, 1
      %s74 = scalar_select %p71, %s72, %s73
      %p77 = pneg %p71
      %p78 = scmp.eq.s32.totalorder %s13, 1
      %p79 = por %p77, %p78
      %p80 = scmp.ne.s32.totalorder %s72, %s75
      %p81 = scmp.eq.s32.totalorder %s13, 0
      %p82 = por %p80, %p81
      %p83 = scmp.ne.s32.totalorder %s72, %s75
      %p84 = scmp.eq.s32.totalorder %s18, 1
      %p85 = por %p83, %p84
      %p86 = scmp.ne.s32.totalorder %s75, %s76
      %p87 = scmp.eq.s32.totalorder %s18, 0
      %p88 = por %p86, %p87
      %p89 = scmp.ne.s32.totalorder %s75, %s76
      %p90 = scmp.eq.s32.totalorder %s19, 1
      %p91 = por %p89, %p90
      %p93 = scmp.ne.s32.totalorder %s76, %s92
      %p94 = scmp.eq.s32.totalorder %s19, 0
      %p95 = por %p93, %p94
      %s97 = sadd.s32 %s96, 1
      %p100 = scmp.eq.s32.totalorder %s13, 1
      %p101 = scmp.ne.s32.totalorder %s96, %s98
      %p102 = scmp.eq.s32.totalorder %s13, 0
      %p103 = por %p101, %p102
      %p104 = scmp.ne.s32.totalorder %s96, %s98
      %p105 = scmp.eq.s32.totalorder %s18, 1
      %p106 = por %p104, %p105
      %p107 = scmp.ne.s32.totalorder %s98, %s99
      %p108 = scmp.eq.s32.totalorder %s18, 0
      %p109 = por %p107, %p108
      %p110 = scmp.ne.s32.totalorder %s98, %s99
      %p111 = scmp.eq.s32.totalorder %s19, 1
      %p112 = por %p110, %p111
      %p114 = scmp.ne.s32.totalorder %s99, %s113
      %p115 = scmp.eq.s32.totalorder %s19, 0
      %p116 = por %p114, %p115
      %s118 = sadd.s32 %s117, 1
      %p121 = scmp.eq.s32.totalorder %s13, 1
      %p122 = scmp.ne.s32.totalorder %s117, %s119
      %p123 = scmp.eq.s32.totalorder %s13, 0
      %p124 = por %p122, %p123
      %p125 = scmp.ne.s32.totalorder %s117, %s119
      %p126 = scmp.eq.s32.totalorder %s18, 1
      %p127 = por %p125, %p126
      %p128 = scmp.ne.s32.totalorder %s119, %s120
      %p129 = scmp.eq.s32.totalorder %s18, 0
      %p130 = por %p128, %p129
      %p131 = scmp.ne.s32.totalorder %s119, %s120
      %p132 = scmp.eq.s32.totalorder %s19, 1
      %p133 = por %p131, %p132
      %p135 = scmp.ne.s32.totalorder %s120, %s134
      %p136 = scmp.eq.s32.totalorder %s19, 0
      %p137 = por %p135, %p136
      %s138 = ssub.s32 %s20, %s39
      %s139 = ssub.s32 %s21, %s35
      %s140 = sor.u32 %s138, %s139
      %p141 = scmp.eq.s32.totalorder %s140, 0
      %s143 = sadd.s32 %s142, 1
      %s144 = scalar_select %p141, %s142, %s143
      %p147 = pneg %p141
      %p148 = scmp.eq.s32.totalorder %s13, 1
      %p149 = por %p147, %p148
      %p150 = scmp.ne.s32.totalorder %s142, %s145
      %p151 = scmp.eq.s32.totalorder %s13, 0
      %p152 = por %p150, %p151
      %p153 = scmp.ne.s32.totalorder %s142, %s145
      %p154 = scmp.eq.s32.totalorder %s18, 1
      %p155 = por %p153, %p154
      %p156 = scmp.ne.s32.totalorder %s145, %s146
      %p157 = scmp.eq.s32.totalorder %s18, 0
      %p158 = por %p156, %p157
      %p159 = scmp.ne.s32.totalorder %s145, %s146
      %p160 = scmp.eq.s32.totalorder %s19, 1
      %p161 = por %p159, %p160
      %p163 = scmp.ne.s32.totalorder %s146, %s162
      %p164 = scmp.eq.s32.totalorder %s19, 0
      %p165 = por %p163, %p164
      %p166 = scmp.le.s32.totalorder 1, %s13
      %p167 = scmp.lt.s32.totalorder %s13, 3
      %p168 = pnand %p166, %p167
      %p169 = pneg %p168
      // Predicated region
      $region9: #{tpu_custom_call.1} parent=5 // pred_check
        _
      $region10: #{tpu_custom_call.1} parent=5 // pred_check_branch
        %171 = sbr.rel (%p168) target = $region12
      $region11: #{tpu_custom_call.1} parent=5 // pred_region
        %s172 = ssub.s32 %s13, 1
        // Predicated region
        $region13: #{tpu_custom_call.1} parent=11 // pred_check
          %p173 = pneg %p88
        $region14: #{tpu_custom_call.1} parent=11 // pred_check_branch
          %175 = sbr.rel (%p173) target = $region16
        $region15: #{tpu_custom_call.1} parent=11 // pred_region
          %p176 = scmp.lt.s32.totalorder %s25, 0
          %s177 = scalar_select %p176, %s25, 0
          %s178 = smul.addr %s177, 8
          %s179 = scalar_lea.vmem %s1, %s178
        $region16: #{tpu_custom_call.1} parent=11 // pred_fallthru
          _
        // Predicated region
        $region17: #{tpu_custom_call.1} parent=11 // pred_check
          %p180 = pneg %p109
        $region18: #{tpu_custom_call.1} parent=11 // pred_check_branch
          %182 = sbr.rel (%p180) target = $region20
        $region19: #{tpu_custom_call.1} parent=11 // pred_region
          _
        $region20: #{tpu_custom_call.1} parent=11 // pred_fallthru
          _
        // Predicated region
        $region21: #{tpu_custom_call.1} parent=11 // pred_check
          %p183 = pneg %p130
        $region22: #{tpu_custom_call.1} parent=11 // pred_check_branch
          %185 = sbr.rel (%p183) target = $region24
        $region23: #{tpu_custom_call.1} parent=11 // pred_region
          _
        $region24: #{tpu_custom_call.1} parent=11 // pred_fallthru
          _
      $region12: #{tpu_custom_call.1} parent=5 // pred_fallthru
        _
      %p186 = scmp.lt.s32.totalorder %s13, 2
      // Predicated region
      $region25: #{tpu_custom_call.1} parent=5 // pred_check
        %p187 = pneg %p186
      $region26: #{tpu_custom_call.1} parent=5 // pred_check_branch
        %189 = sbr.rel (%p187) target = $region28
      $region27: #{tpu_custom_call.1} parent=5 // pred_region
        // Predicated region
        $region29: #{tpu_custom_call.1} parent=27 // pred_check
          %p190 = pneg %p56
        $region30: #{tpu_custom_call.1} parent=27 // pred_check_branch
          %192 = sbr.rel (%p190) target = $region32
        $region31: #{tpu_custom_call.1} parent=27 // pred_region
          %s193 = smul.u32 2, %s21
          %p194 = scmp.lt.s32.totalorder %s20, 1
          %s195 = scalar_select %p194, %s20, 1
          %p196 = scmp.lt.s32.totalorder %s22, 0
          %s197 = scalar_select %p196, %s22, 0
          %p198 = scmp.lt.s32.totalorder %s193, 1
          %s199 = scalar_select %p198, %s193, 1
          %s200 = smul.addr %s197, 2
          %s201 = sadd.s32 %s199, %s200
          %s202 = smul.addr %s195, 2
          %s203 = sadd.s32 %s201, %s202
          %s204 = smul.addr %s203, 4
          %s205 = scalar_lea.vmem %s0, %s204
          %s206 = smul.u32 2, %s21
        $region32: #{tpu_custom_call.1} parent=27 // pred_fallthru
          _
      $region28: #{tpu_custom_call.1} parent=5 // pred_fallthru
        _
      %p207 = scmp.le.s32.totalorder 1, %s13
      %p208 = scmp.lt.s32.totalorder %s13, 3
      %p209 = pnand %p207, %p208
      %p210 = pneg %p209
      // Predicated region
      $region33: #{tpu_custom_call.1} parent=5 // pred_check
        _
      $region34: #{tpu_custom_call.1} parent=5 // pred_check_branch
        %212 = sbr.rel (%p209) target = $region36
      $region35: #{tpu_custom_call.1} parent=5 // pred_region
        %s213 = ssub.s32 %s13, 1
        %s214 = smul.u32 2, %s24
        %p215 = scmp.lt.s32.totalorder %s23, 1
        %s216 = scalar_select %p215, %s23, 1
        %p217 = scmp.lt.s32.totalorder %s25, 0
        %s218 = scalar_select %p217, %s25, 0
        %p219 = scmp.lt.s32.totalorder %s214, 1
        %s220 = scalar_select %p219, %s214, 1
        %s221 = smul.addr %s218, 2
        %s222 = sadd.s32 %s220, %s221
        %s223 = smul.addr %s216, 2
        %s224 = sadd.s32 %s222, %s223
        %s225 = smul.addr %s224, 4
        %s226 = scalar_lea.vmem %s0, %s225
        %p227 = pneg %p62
        %p228 = pneg %p59
        %p229 = scmp.lt.s32.totalorder %s25, 0
        %s230 = scalar_select %p229, %s25, 0
        %s231 = smul.addr %s230, 8
        %s232 = scalar_lea.vmem %s1, %s231
        %p233 = pneg %p88
        %p234 = pneg %p85
        %p235 = pneg %p109
        %p236 = pneg %p106
        %p237 = pneg %p130
        %p238 = pneg %p127
        %p239 = pneg %p158
        %p240 = pneg %p155
        %s241 = sand.u32 %s145, 1
        %s242 = scalar_lea.sflag [#allocation4], %s241
        %s243 = sand.u32 %s145, 1
        %s244 = smul.addr %s243, 16
        %s245 = scalar_lea.vmem [#allocation3], %s244
        %s246 = smul.u32 2, %s24
        %p247 = scmp.lt.s32.totalorder %s23, 1
        %s248 = scalar_select %p247, %s23, 1
        %p249 = scmp.lt.s32.totalorder %s25, 0
        %s250 = scalar_select %p249, %s25, 0
        %p251 = scmp.lt.s32.totalorder %s246, 1
        %s252 = scalar_select %p251, %s246, 1
        %s253 = smul.addr %s250, 2
        %s254 = sadd.s32 %s252, %s253
        %s255 = smul.addr %s248, 2
        %s256 = sadd.s32 %s254, %s255
        %s257 = smul.addr %s256, 4
        %s258 = scalar_lea.vmem %s0, %s257
        %s259 = smul.u32 2, %s24
        %p260 = scmp.lt.s32.totalorder %s25, 0
        %s261 = scalar_select %p260, %s25, 0
        %s262 = smul.addr %s261, 8
        %s263 = scalar_lea.vmem %s1, %s262
        %s264 = smul.u32 2, %s24
        %v265 = vld [vmem:[%s263] sm:$0xff]
        %v266 = vld [vmem:[%s258] sm:$0xff]
        %v268 = vcombine.high %v266, %v266
        %vm269 = vcmask 31744
        %v271 = vsel %vm269, %v265, 0
        %vm273 = vcmask 1043456
        %v274 = vsel %vm273, %v266, 0
        %v276 = vsel %vm273, %v268, 0
        %278 = vmatprep.subr.mxu0 0.0
        %279 = vmatpush1.msra.mxu0 0.0
        %280 = vmatprep.subr.mxu0 0.0
        %281 = vmatpush1.msra.mxu0 0.0
        %282 = vmatprep.subr.mxu0 0.0
        %283 = vmatpush1.msra.mxu0 0.0
        %284 = vmatprep.subr.mxu0 0.0
        %285 = vmatpush1.msra.mxu0 0.0
        %286 = vmatprep.subr.mxu0 0.0
        %287 = vmatpush1.msra.mxu0 0.0
        %288 = vmatprep.subr.mxu0 0.0
        %289 = vmatpush1.msra.mxu0 0.0
        %290 = vmatprep.subr.mxu0 0.0
        %291 = vmatpush1.msra.mxu0 0.0
        %292 = vmatprep.subr.mxu0 0.0
        %293 = vmatpush1.msra.mxu0 0.0
        %294 = vmatprep.subr.mxu0 0.0
        %295 = vmatpush1.msra.mxu0 0.0
        %296 = vmatprep.subr.mxu0 0.0
        %297 = vmatpush1.msra.mxu0 0.0
        %298 = vmatprep.subr.mxu0 0.0
        %299 = vmatpush1.msra.mxu0 0.0
        %300 = vmatprep.subr.mxu0 0.0
        %301 = vmatpush1.msra.mxu0 0.0
        %302 = vmatprep.subr.mxu0 0.0
        %303 = vmatpush1.msra.mxu0 0.0
        %304 = vmatprep.subr.mxu0 0.0
        %305 = vmatpush1.msra.mxu0 0.0
        %306 = vmatprep.subr.mxu0 0.0
        %307 = vmatpush1.msra.mxu0 0.0
        %308 = vmatprep.subr.mxu0 %v276
        %309 = vmatpush1.msra.mxu0 %v274
        %310 = vmatprep.subr.mxu0 0.0
        %311 = vmatpush2.msra.mxu0 0.0
        %312 = vmatprep.subr.mxu0 0.0
        %313 = vmatpush2.msra.mxu0 0.0
        %314 = vmatprep.subr.mxu0 0.0
        %315 = vmatpush2.msra.mxu0 0.0
        %316 = vmatprep.subr.mxu0 0.0
        %317 = vmatpush2.msra.mxu0 0.0
        %318 = vmatprep.subr.mxu0 0.0
        %319 = vmatpush2.msra.mxu0 0.0
        %320 = vmatprep.subr.mxu0 0.0
        %321 = vmatpush2.msra.mxu0 0.0
        %322 = vmatprep.subr.mxu0 0.0
        %323 = vmatpush2.msra.mxu0 0.0
        %324 = vmatprep.subr.mxu0 0.0
        %325 = vmatpush2.msra.mxu0 0.0
        %326 = vmatprep.subr.mxu0 0.0
        %327 = vmatpush2.msra.mxu0 0.0
        %328 = vmatprep.subr.mxu0 0.0
        %329 = vmatpush2.msra.mxu0 0.0
        %330 = vmatprep.subr.mxu0 0.0
        %331 = vmatpush2.msra.mxu0 0.0
        %332 = vmatprep.subr.mxu0 0.0
        %333 = vmatpush2.msra.mxu0 0.0
        %334 = vmatprep.subr.mxu0 0.0
        %335 = vmatpush2.msra.mxu0 0.0
        %336 = vmatprep.subr.mxu0 0.0
        %337 = vmatpush2.msra.mxu0 0.0
        %338 = vmatprep.subr.mxu0 0.0
        %339 = vmatpush2.msra.mxu0 0.0
        %340 = vmatprep.subr.mxu0 0.0
        %341 = vmatpush2.msra.mxu0 0.0
        %342 = vmatprep.mubr.f32.mxu0 0.0
        %343 = vmatmul.mubr.f32.gmra.mxu0 %v271
        %v344 = vpop.f32.mrf.mxu0
        %v345 = vadd.f32 0.0, %v344
        %v346 = vpop.f32.mrf.mxu0
        %v347 = vadd.f32 0.0, %v346
        %348 = vdwg.mxu0
        %p349 = scmp.eq.s32.totalorder %s25, 0
        // Predicated region
        $region37: #{tpu_custom_call.1} parent=35 // pred_check
          %p350 = pneg %p349
        $region38: #{tpu_custom_call.1} parent=35 // pred_check_branch
          %352 = sbr.rel (%p350) target = $region40
        $region39: #{tpu_custom_call.1} parent=35 // pred_region
          %353 = vst [vmem:[#allocation2] sm:$0xff] %v345
          %354 = vst [vmem:[#allocation2 + $0x8] sm:$0xff] %v347
        $region40: #{tpu_custom_call.1} parent=35 // pred_fallthru
          _
        %p355 = scmp.gt.s32.totalorder %s25, 0
        // Predicated region
        $region41: #{tpu_custom_call.1} parent=35 // pred_check
          %p356 = pneg %p355
        $region42: #{tpu_custom_call.1} parent=35 // pred_check_branch
          %358 = sbr.rel (%p356) target = $region44
        $region43: #{tpu_custom_call.1} parent=35 // pred_region
          %v359 = vld [vmem:[#allocation2] sm:$0xff]
          %v360 = vld [vmem:[#allocation2 + $0x8] sm:$0xff]
          %v361 = vadd.f32 %v359, %v345
          %v362 = vadd.f32 %v360, %v347
          %363 = vst [vmem:[#allocation2] sm:$0xff] %v361
          %364 = vst [vmem:[#allocation2 + $0x8] sm:$0xff] %v362
        $region44: #{tpu_custom_call.1} parent=35 // pred_fallthru
          _
        // Predicated region
        $region45: #{tpu_custom_call.1} parent=35 // pred_check
          %p365 = pneg %p349
        $region46: #{tpu_custom_call.1} parent=35 // pred_check_branch
          %367 = sbr.rel (%p365) target = $region48
        $region47: #{tpu_custom_call.1} parent=35 // pred_region
          %v368 = vld [vmem:[#allocation2] sm:$0xff]
          %v369 = vld [vmem:[#allocation2 + $0x8] sm:$0xff]
          %v370 = vld [vmem:[%s2] sm:$0xff]
          %372 = vset.pattern.permute.xlu0 0
          %373 = vperm.xlu0 %372, %v370
          %v374 = vpop.permute.xlu0 %373
          %v376 = vmul.f32 %v368, %v374
          %v377 = vmul.f32 %v369, %v374
          %v378 = vld [vmem:[%s3] sm:$0xff]
          %380 = vset.pattern.permute.xlu0 0
          %381 = vperm.xlu0 %380, %v378
          %v382 = vpop.permute.xlu0 %381
          %v384 = vadd.f32 %v376, %v382
          %v385 = vadd.f32 %v377, %v382
          %v386 = vmax.f32 %v384, 0.0
          %v387 = vmax.f32 %v385, 0.0
          %388 = vst [vmem:[%s245] sm:$0xff] %v386
          %389 = vst [vmem:[%s245 + $0x8] sm:$0xff] %v387
        $region48: #{tpu_custom_call.1} parent=35 // pred_fallthru
          _
        %s390 = sand.u32 %s145, 1
        %s391 = scalar_lea.sflag [#allocation4], %s390
        %s392 = sand.u32 %s145, 1
        %s393 = smul.addr %s392, 16
        %s394 = scalar_lea.vmem [#allocation3], %s393
        // Predicated region
        $region49: #{tpu_custom_call.1} parent=35 // pred_check
          %p395 = pneg %p155
        $region50: #{tpu_custom_call.1} parent=35 // pred_check_branch
          %397 = sbr.rel (%p395) target = $region52
        $region51: #{tpu_custom_call.1} parent=35 // pred_region
          %s398 = smul.u32 2, %s24
          %s400 = ssub.s32 256, 256
          %401 = vsyncadd %s391, %s400
          %s402 = smul.addr %s23, 2
          %s403 = sadd.s32 %s398, %s402
          %s404 = smul.addr %s403, 128
          %s405 = scalar_lea.hbm %s4, %s404
          %s407 = sshll.u32 %s394, 4
          %s408 = int_to_ptr.vmem [resolvable:$true] %s407
          %410 = dma.vmem_to_hbm [thread:$0]  %s408, 256, %s405, %s391
        $region52: #{tpu_custom_call.1} parent=35 // pred_fallthru
          _
      $region36: #{tpu_custom_call.1} parent=5 // pred_fallthru
        _
      %p411 = scmp.le.s32.totalorder 2, %s13
      // Predicated region
      $region53: #{tpu_custom_call.1} parent=5 // pred_check
        %p412 = pneg %p411
      $region54: #{tpu_custom_call.1} parent=5 // pred_check_branch
        %414 = sbr.rel (%p412) target = $region56
      $region55: #{tpu_custom_call.1} parent=5 // pred_region
        %s415 = ssub.s32 %s13, 2
        // Predicated region
        $region57: #{tpu_custom_call.1} parent=55 // pred_check
          %p416 = pneg %p161
        $region58: #{tpu_custom_call.1} parent=55 // pred_check_branch
          %418 = sbr.rel (%p416) target = $region60
        $region59: #{tpu_custom_call.1} parent=55 // pred_region
          %s419 = sand.u32 %s146, 1
          %s420 = scalar_lea.sflag [#allocation4], %s419
          %s421 = sand.u32 %s146, 1
          %s422 = smul.addr %s421, 16
          %s423 = scalar_lea.vmem [#allocation3], %s422
          %424 = dma.done %s420, 256
        $region60: #{tpu_custom_call.1} parent=55 // pred_fallthru
          _
      $region56: #{tpu_custom_call.1} parent=5 // pred_fallthru
        _
    $region6: #{tpu_custom_call.1} parent=1 // loop_footer
      %s17 = sadd.s32 1, %s13
    $region7: #{tpu_custom_call.1} parent=1 // loop_footer_branch
      %12 = sbr.rel target = $region3
    $region8: #{tpu_custom_call.1} parent=1 // loop_exit
      _
    %425 = vsyncpa [#allocation4], 1
    %s426 = scalar_lea.sflag [#allocation4], 1
    %427 = vsyncpa %s426, 1

</llo_original>
